<compile_context>
chip_gen: v7x
topology: tpu7x:2x2x1
jax: 0.10.0
libtpu: 0.0.40
codegen_flags: <defaults>
</compile_context>

<pallas_src>
import jax
import jax.numpy as jnp
from jax.experimental import pallas as pl
from jax.experimental.pallas import tpu as pltpu


def _imm_kernel(x_ref, w_ref, y_ref):
    # x_ref: (tm, Dp) lane-dense row tile; w_ref: full (Dp, Dp) weight,
    # resident in VMEM across the whole grid via a constant index_map.
    y_ref[...] = jnp.dot(
        x_ref[...], w_ref[...], preferred_element_type=jnp.float32
    ).astype(y_ref.dtype)


def _round_up(x, m):
    return ((x + m - 1) // m) * m


def _num_tensorcores():
    # v7x has 2 TensorCores per chip; v5e/v6e have 1. Conservative fallback.
    try:
        kind = jax.devices()[0].device_kind.lower()
        if "v7" in kind:
            return 2
    except Exception:
        pass
    return 1


def _pick_tile(rows, row_bytes, num_cores, target_tile_bytes):
    """Pick the row-tile so each input tile is ~target_tile_bytes.

    Splits across the grid only as much as needed to amortize the ~0.35 us
    per-step overhead; on 2-TC chips it additionally rounds the step count
    up to a multiple of the core count, but only when each core's tile
    still moves >= ~2 MiB (otherwise the split is pure overhead).
    """
    total = rows * row_bytes
    steps = max(1, pl.cdiv(total, target_tile_bytes))
    if num_cores > 1 and total >= num_cores * (2 << 20):
        steps = num_cores * pl.cdiv(steps, num_cores)
    tm = _round_up(pl.cdiv(rows, steps), 8)      # sublane-divisible tile
    return min(tm, _round_up(rows, 8))


def invertible_mm(inputs, W, mode="direct", target_tile_bytes=None):
    """Forward of InvertibleMM. Returns (inputs @ M, logabsdet * ones((B,1)))."""
    B, D = inputs.shape
    assert W.shape == (D, D)

    # TODO(synk): slogdet / matrix inverse (LU factorization) have no clean
    # Pallas equivalent; they only touch the tiny (D, D) parameter, so they
    # run as plain XLA glue.
    _, logabsdet = jnp.linalg.slogdet(W.astype(jnp.float32))
    if mode == "direct":
        mat, ld = W, logabsdet
    else:
        mat = jnp.linalg.inv(W.astype(jnp.float32)).astype(W.dtype)
        ld = -logabsdet

    out_dtype = inputs.dtype
    # Only the tiny (D, D) weight is cast; x is never cast in the wrapper
    # (a wrapper-side cast is an extra unfused HBM pass over x).
    mat = mat.astype(inputs.dtype)

    # Lane packing: when D < 128 divides 128 and B divides evenly, fold
    # p = 128 // D logical rows into one 128-lane row (row-major reshape is
    # free) and use a block-diagonal weight, so every vreg / MXU operand /
    # store is lane-dense (unmasked vst, no half-empty vregs).
    x = inputs
    p = 1
    if D < 128 and 128 % D == 0 and B % (128 // D) == 0:
        p = 128 // D
        x = inputs.reshape(B // p, p * D)
        mat = jnp.kron(jnp.eye(p, dtype=mat.dtype), mat)
    rows, Dp = x.shape

    in_itemsize = jnp.dtype(x.dtype).itemsize
    out_itemsize = jnp.dtype(out_dtype).itemsize
    row_bytes = Dp * in_itemsize

    num_cores = _num_tensorcores()
    if target_tile_bytes is None:
        # ~4 MiB input tiles; ~8 MiB on v7x (3.2 TB/s HBM, 2 TCs).
        target_tile_bytes = (8 << 20) if num_cores > 1 else (4 << 20)
    tm = _pick_tile(rows, row_bytes, num_cores, target_tile_bytes)
    grid = (pl.cdiv(rows, tm),)   # no padding: Pallas handles the ragged last block

    # Double-buffered input + output tiles + resident weight, with headroom.
    w_bytes = Dp * Dp * jnp.dtype(mat.dtype).itemsize
    vmem_needed = 2 * tm * Dp * in_itemsize + 2 * tm * Dp * out_itemsize + 2 * w_bytes
    vmem_limit = int(min(max(vmem_needed + (4 << 20), 32 << 20), 48 << 20))

    cost = pl.CostEstimate(
        flops=2 * rows * Dp * Dp,
        transcendentals=0,
        bytes_accessed=in_itemsize * rows * Dp       # x in
        + w_bytes                                    # W in (resident)
        + out_itemsize * rows * Dp,                  # y out
    )

    y = pl.pallas_call(
        _imm_kernel,
        out_shape=jax.ShapeDtypeStruct((rows, Dp), out_dtype),
        grid=grid,
        in_specs=[
            pl.BlockSpec((tm, Dp), lambda i: (i, 0)),   # lane-dense row tile
            pl.BlockSpec((Dp, Dp), lambda i: (0, 0)),   # full W, constant map:
                                                        # stays resident in VMEM
        ],
        out_specs=pl.BlockSpec((tm, Dp), lambda i: (i, 0)),
        compiler_params=pltpu.CompilerParams(
            dimension_semantics=("parallel",),
            vmem_limit_bytes=vmem_limit,
        ),
        cost_estimate=cost,
    )(x, mat)

    if p > 1:
        y = y.reshape(B, D)

    # Per-row log|det W| is a pure scalar broadcast -> done in the wrapper
    # (a (tm, 1) kernel output would force masked vst.msk partial stores).
    # Kept in float32 on purpose (slogdet's compute dtype).
    ldet = jnp.full((B, 1), ld, dtype=jnp.float32)
    return y, ldet


def _orthogonal_init(key, n, dtype=jnp.float32):
    # Deterministic stand-in for nn.init.orthogonal_: QR of a Gaussian matrix.
    a = jax.random.normal(key, (n, n), dtype=jnp.float32)
    q, r = jnp.linalg.qr(a)
    q = q * jnp.sign(jnp.diag(r))[None, :]
    return q.astype(dtype)


if __name__ == "__main__":
    key = jax.random.PRNGKey(0)
    k_w, k_x, k_x2, k_x3 = jax.random.split(key, 4)

    batch, num_inputs = 8, 64
    W = _orthogonal_init(k_w, num_inputs)
    x = jax.random.normal(k_x, (batch, num_inputs), dtype=jnp.float32)

    # direct mode (lane-packed 64 -> 128 path)
    y, logdet = invertible_mm(x, W, mode="direct")
    jax.block_until_ready((y, logdet))
    y_ref = x @ W
    ld_ref = jnp.full((batch, 1), jnp.linalg.slogdet(W)[1], dtype=jnp.float32)
    assert y.shape == (batch, num_inputs) and logdet.shape == (batch, 1)
    assert jnp.allclose(y, y_ref, atol=1e-5, rtol=1e-5)
    assert jnp.allclose(logdet, ld_ref, atol=1e-5, rtol=1e-5)

    # inverse mode round-trip
    y_inv, logdet_inv = invertible_mm(y, W, mode="inverse")
    jax.block_until_ready((y_inv, logdet_inv))
    assert jnp.allclose(y_inv, x, atol=1e-4, rtol=1e-4)
    assert jnp.allclose(logdet_inv, -ld_ref, atol=1e-5, rtol=1e-5)

    # even, non-tile-multiple batch: lane-packed + ragged last block, no pad/slice.
    batch2 = 50
    x2 = jax.random.normal(k_x2, (batch2, num_inputs), dtype=jnp.float32)
    y2, logdet2 = invertible_mm(x2, W, mode="direct")
    jax.block_until_ready((y2, logdet2))
    assert y2.shape == (batch2, num_inputs) and logdet2.shape == (batch2, 1)
    assert jnp.allclose(y2, x2 @ W, atol=1e-5, rtol=1e-5)

    # odd batch: falls back to the unpacked (full-lane-extent D=64) path.
    batch3 = 7
    x3 = jax.random.normal(k_x3, (batch3, num_inputs), dtype=jnp.float32)
    y3, logdet3 = invertible_mm(x3, W, mode="direct")
    jax.block_until_ready((y3, logdet3))
    assert y3.shape == (batch3, num_inputs) and logdet3.shape == (batch3, 1)
    assert jnp.allclose(y3, x3 @ W, atol=1e-5, rtol=1e-5)

    # force a multi-step grid with a ragged last block (tiny tile target)
    # to exercise the pipelined path without a huge batch.
    batch4 = 52
    x4 = jax.random.normal(k_x2, (batch4, num_inputs), dtype=jnp.float32)
    y4, _ = invertible_mm(x4, W, mode="direct", target_tile_bytes=4096)
    jax.block_until_ready(y4)
    assert jnp.allclose(y4, x4 @ W, atol=1e-5, rtol=1e-5)

    print("KERNEL_OK")
</pallas_src>

<mosaic_0001>
module attributes {stable_mosaic.version = 11 : i64} {
  func.func @_imm_kernel(%arg0: i32, %arg1: memref<8x128xf32, #tpu.memory_space<vmem>>, %arg2: memref<128x128xf32, #tpu.memory_space<vmem>>, %arg3: memref<8x128xf32, #tpu.memory_space<vmem>>) attributes {dimension_semantics = [#tpu.dimension_semantics<parallel>], iteration_bounds = array<i64: 1>, scalar_prefetch = 0 : i64, scratch_operands = 0 : i64, tpu.core_type = #tpu.core_type<tc>, window_params = [{transform_indices = @transform_0, window_bounds = array<i64: 8, 128>}, {pipeline_mode = #tpu.pipeline_mode<synchronous>, transform_indices = @transform_1, window_bounds = array<i64: 128, 128>}, {transform_indices = @transform_2, window_bounds = array<i64: 8, 128>}]} {
    %c0 = arith.constant 0 : index
    %c0_0 = arith.constant 0 : index
    %0 = vector.load %arg1[%c0, %c0_0] : memref<8x128xf32, #tpu.memory_space<vmem>>, vector<8x128xf32>
    %c0_1 = arith.constant 0 : index
    %c0_2 = arith.constant 0 : index
    %1 = vector.load %arg2[%c0_1, %c0_2] : memref<128x128xf32, #tpu.memory_space<vmem>>, vector<128x128xf32>
    %cst = arith.constant dense<0.000000e+00> : vector<8x128xf32>
    %2 = tpu.matmul %0, %1, %cst {dimension_numbers = #tpu.dot_dimension_numbers<[1], [0], [0], [1], [0, 0, 1, 1], [], []>} : vector<8x128xf32>, vector<128x128xf32>, vector<8x128xf32> -> vector<8x128xf32>
    %c0_3 = arith.constant 0 : index
    %c0_4 = arith.constant 0 : index
    %3 = vector.load %arg3[%c0_3, %c0_4] : memref<8x128xf32, #tpu.memory_space<vmem>>, vector<8x128xf32>
    tpu.vector_store %arg3[%c0_3, %c0_4], %2 {strides = array<i32>} : memref<8x128xf32, #tpu.memory_space<vmem>>, vector<8x128xf32>,
    return
  }
  func.func @transform_0(%arg0: i32) -> (i32, i32) {
    %c0_i32 = arith.constant 0 : i32
    %c0_i32_0 = arith.constant 0 : i32
    return %arg0, %c0_i32 : i32, i32
  }
  func.func @transform_1(%arg0: i32) -> (i32, i32) {
    %c0_i32 = arith.constant 0 : i32
    %c0_i32_0 = arith.constant 0 : i32
    %c0_i32_1 = arith.constant 0 : i32
    return %c0_i32, %c0_i32_0 : i32, i32
  }
  func.func @transform_2(%arg0: i32) -> (i32, i32) {
    %c0_i32 = arith.constant 0 : i32
    %c0_i32_0 = arith.constant 0 : i32
    return %arg0, %c0_i32 : i32, i32
  }
}

</mosaic_0001>

<llo_original>
// kernel: tpu_custom_call.1
$region0: #{tpu_custom_call.1}
  #allocation0 [shape = 'u32[]', space=smem, size = 0x4, offset = 0x4, fixed_abs, tag = 'smem constant byte address 0x4 - core index']
  #allocation1 [shape = 'u32[144,128]{1,0:T(1,128)}', space=vmem, size = 0x12000, scoped, tag = 'internal scratch']
  %s0 = inlined_call_operand.hbm [shape: f32[4,128], index: 0, kind: input, shape index: {}]
  %s1 = inlined_call_operand.hbm [shape: f32[128,128], index: 1, kind: input, shape index: {}]
  %s2 = inlined_call_operand.hbm [shape: f32[4,128], index: 2, kind: output, shape index: {}]
  %s3 = sld [smem:[#allocation0]]
  $region26: #{tpu_custom_call.1} parent=0
    _
  %s5 = ssub.s32 1, %s3
  %s6 = scalar_select 0, %s5, %s3
  $region1: #{tpu_custom_call.1} parent=0
    #allocation2 [shape = 'u8[4096]{0}', space=vmem, size = 0x1000, scoped, tag = 'input window, operand 0, single buffered']
    #allocation3 [shape = 's32[1]{0}', space=sflag, size = 0x4, scoped, tag = 'scoped memory for tpu_custom_call.1']
    #allocation4 [shape = 's32[1]{0}', space=sflag, size = 0x4, scoped, tag = 'scoped memory for tpu_custom_call.1']
    #allocation5 [shape = 'u8[65536]{0}', space=vmem, size = 0x10000, scoped, tag = 'input window, operand 1, single buffered']
    #allocation6 [shape = 's32[1]{0}', space=sflag, size = 0x4, scoped, tag = 'scoped memory for tpu_custom_call.1']
    #allocation7 [shape = 'u8[4096]{0}', space=vmem, size = 0x1000, scoped, tag = 'output window, operand 0, single buffered']
    %7 = vsyncpa [#allocation3], 0
    %8 = vsyncpa [#allocation6], 0
    %9 = vsyncpa [#allocation4], 0
    // Predicated region
    $region2: #{tpu_custom_call.1} parent=1 // pred_check
      _
    $region3: #{tpu_custom_call.1} parent=1 // pred_check_branch
      %11 = sbr.rel (0) target = $region5
    $region4: #{tpu_custom_call.1} parent=1 // pred_region
      %s13 = ssub.s32 128, 64
      %14 = vsyncadd [#allocation3], %s13
      %s15 = sshll.u32 [#allocation2], 4
      %s16 = int_to_ptr.vmem [resolvable:$true] %s15
      %21 = dma.hbm_to_vmem [thread:$0]  %s0, 64, %s16, [#allocation3], 64, 64, 4
    $region5: #{tpu_custom_call.1} parent=1 // pred_fallthru
      _
    // Predicated region
    $region6: #{tpu_custom_call.1} parent=1 // pred_check
      _
    $region7: #{tpu_custom_call.1} parent=1 // pred_check_branch
      %23 = sbr.rel (0) target = $region9
    $region8: #{tpu_custom_call.1} parent=1 // pred_region
      %s25 = ssub.s32 2048, 2048
      %26 = vsyncadd [#allocation6], %s25
      %s27 = sshll.u32 [#allocation5], 4
      %s28 = int_to_ptr.vmem [resolvable:$true] %s27
      %33 = dma.hbm_to_vmem [thread:$0]  %s1, 2048, %s28, [#allocation6], 128, 128, 8
    $region9: #{tpu_custom_call.1} parent=1 // pred_fallthru
      _
    // Predicated region
    $region10: #{tpu_custom_call.1} parent=1 // pred_check
      _
    $region11: #{tpu_custom_call.1} parent=1 // pred_check_branch
      %35 = sbr.rel (0) target = $region13
    $region12: #{tpu_custom_call.1} parent=1 // pred_region
      %36 = dma.done [#allocation3], 128
    $region13: #{tpu_custom_call.1} parent=1 // pred_fallthru
      _
    // Predicated region
    $region14: #{tpu_custom_call.1} parent=1 // pred_check
      _
    $region15: #{tpu_custom_call.1} parent=1 // pred_check_branch
      %38 = sbr.rel (0) target = $region17
    $region16: #{tpu_custom_call.1} parent=1 // pred_region
      %39 = dma.done [#allocation6], 2048
    $region17: #{tpu_custom_call.1} parent=1 // pred_fallthru
      _
    %v40 = vld [vmem:[#allocation2] sm:$0xff]
    %v41 = vld [vmem:[#allocation5] sm:$0xff]
    %v42 = vld [vmem:[#allocation5 + $0x8] sm:$0xff]
    %v43 = vld [vmem:[#allocation5 + $0x10] sm:$0xff]
    %v44 = vld [vmem:[#allocation5 + $0x18] sm:$0xff]
    %v45 = vld [vmem:[#allocation5 + $0x20] sm:$0xff]
    %v46 = vld [vmem:[#allocation5 + $0x28] sm:$0xff]
    %v47 = vld [vmem:[#allocation5 + $0x30] sm:$0xff]
    %v48 = vld [vmem:[#allocation5 + $0x38] sm:$0xff]
    %v49 = vld [vmem:[#allocation5 + $0x40] sm:$0xff]
    %v50 = vld [vmem:[#allocation5 + $0x48] sm:$0xff]
    %v51 = vld [vmem:[#allocation5 + $0x50] sm:$0xff]
    %v52 = vld [vmem:[#allocation5 + $0x58] sm:$0xff]
    %v53 = vld [vmem:[#allocation5 + $0x60] sm:$0xff]
    %v54 = vld [vmem:[#allocation5 + $0x68] sm:$0xff]
    %v55 = vld [vmem:[#allocation5 + $0x70] sm:$0xff]
    %v56 = vld [vmem:[#allocation5 + $0x78] sm:$0xff]
    %57 = vmatprep.subr.mxu0 0.0
    %58 = vmatpush1.msra.mxu0 %v41
    %59 = vmatprep.subr.mxu0 0.0
    %60 = vmatpush1.msra.mxu0 %v42
    %61 = vmatprep.subr.mxu0 0.0
    %62 = vmatpush1.msra.mxu0 %v43
    %63 = vmatprep.subr.mxu0 0.0
    %64 = vmatpush1.msra.mxu0 %v44
    %65 = vmatprep.subr.mxu0 0.0
    %66 = vmatpush1.msra.mxu0 %v45
    %67 = vmatprep.subr.mxu0 0.0
    %68 = vmatpush1.msra.mxu0 %v46
    %69 = vmatprep.subr.mxu0 0.0
    %70 = vmatpush1.msra.mxu0 %v47
    %71 = vmatprep.subr.mxu0 0.0
    %72 = vmatpush1.msra.mxu0 %v48
    %73 = vmatprep.subr.mxu0 0.0
    %74 = vmatpush1.msra.mxu0 %v49
    %75 = vmatprep.subr.mxu0 0.0
    %76 = vmatpush1.msra.mxu0 %v50
    %77 = vmatprep.subr.mxu0 0.0
    %78 = vmatpush1.msra.mxu0 %v51
    %79 = vmatprep.subr.mxu0 0.0
    %80 = vmatpush1.msra.mxu0 %v52
    %81 = vmatprep.subr.mxu0 0.0
    %82 = vmatpush1.msra.mxu0 %v53
    %83 = vmatprep.subr.mxu0 0.0
    %84 = vmatpush1.msra.mxu0 %v54
    %85 = vmatprep.subr.mxu0 0.0
    %86 = vmatpush1.msra.mxu0 %v55
    %87 = vmatprep.subr.mxu0 0.0
    %88 = vmatpush1.msra.mxu0 %v56
    %89 = vmatprep.subr.mxu0 0.0
    %90 = vmatpush1.msra.mxu0 0.0
    %91 = vmatprep.subr.mxu0 0.0
    %92 = vmatpush1.msra.mxu0 0.0
    %93 = vmatprep.subr.mxu0 0.0
    %94 = vmatpush1.msra.mxu0 0.0
    %95 = vmatprep.subr.mxu0 0.0
    %96 = vmatpush1.msra.mxu0 0.0
    %97 = vmatprep.subr.mxu0 0.0
    %98 = vmatpush1.msra.mxu0 0.0
    %99 = vmatprep.subr.mxu0 0.0
    %100 = vmatpush1.msra.mxu0 0.0
    %101 = vmatprep.subr.mxu0 0.0
    %102 = vmatpush1.msra.mxu0 0.0
    %103 = vmatprep.subr.mxu0 0.0
    %104 = vmatpush1.msra.mxu0 0.0
    %105 = vmatprep.subr.mxu0 0.0
    %106 = vmatpush1.msra.mxu0 0.0
    %107 = vmatprep.subr.mxu0 0.0
    %108 = vmatpush1.msra.mxu0 0.0
    %109 = vmatprep.subr.mxu0 0.0
    %110 = vmatpush1.msra.mxu0 0.0
    %111 = vmatprep.subr.mxu0 0.0
    %112 = vmatpush1.msra.mxu0 0.0
    %113 = vmatprep.subr.mxu0 0.0
    %114 = vmatpush1.msra.mxu0 0.0
    %115 = vmatprep.subr.mxu0 0.0
    %116 = vmatpush1.msra.mxu0 0.0
    %117 = vmatprep.subr.mxu0 0.0
    %118 = vmatpush1.msra.mxu0 0.0
    %119 = vmatprep.subr.mxu0 0.0
    %120 = vmatpush1.msra.mxu0 0.0
    %121 = vmatprep.mubr.f32.mxu0 0.0
    %122 = vmatmul.mubr.f32.gmra.mrb[0].mxu0 %v40
    %v123 = vpop.f32.mrb[0].mxu0
    %v124 = vadd.f32 0.0, %v123
    %v125 = vpop.f32.mrb[0].mxu0
    %126 = vdwg.mxu0
    %127 = vst [vmem:[#allocation7] sm:$0xff] %v124
    // Predicated region
    $region18: #{tpu_custom_call.1} parent=1 // pred_check
      _
    $region19: #{tpu_custom_call.1} parent=1 // pred_check_branch
      %129 = sbr.rel (0) target = $region21
    $region20: #{tpu_custom_call.1} parent=1 // pred_region
      %s131 = ssub.s32 128, 64
      %132 = vsyncadd [#allocation4], %s131
      %s133 = sshll.u32 [#allocation7], 4
      %s134 = int_to_ptr.vmem [resolvable:$true] %s133
      %139 = dma.vmem_to_hbm [thread:$0]  %s134, 64, %s2, [#allocation4], 64, 64, 4
    $region21: #{tpu_custom_call.1} parent=1 // pred_fallthru
      _
    // Predicated region
    $region22: #{tpu_custom_call.1} parent=1 // pred_check
      _
    $region23: #{tpu_custom_call.1} parent=1 // pred_check_branch
      %141 = sbr.rel (0) target = $region25
    $region24: #{tpu_custom_call.1} parent=1 // pred_region
      %142 = dma.done [#allocation4], 128
    $region25: #{tpu_custom_call.1} parent=1 // pred_fallthru
      _
    %143 = vsyncpa [#allocation3], 1
    %144 = vsyncpa [#allocation6], 1
    %145 = vsyncpa [#allocation4], 1

</llo_original>
